<compile_context>
chip_gen: v5e
topology: v5e:2x2
jax: 0.10.0
libtpu: 0.0.40
codegen_flags: <defaults>
</compile_context>

<pallas_src>
import functools

import jax
import jax.numpy as jnp
from jax.experimental import pallas as pl
from jax.experimental.pallas import tpu as pltpu

LANE = 128
SUBLANE = 8


def _round_up(n: int, m: int) -> int:
    return ((n + m - 1) // m) * m


def qnet_kernel(x_ref, w1_ref, b1_ref, w2_ref, b2_ref, w3_ref, b3_ref, o_ref):
    # Layer 1: Linear + ReLU   (MXU matmul, f32 accumulate; bias/ReLU on VPU in f32)
    h1 = jnp.dot(x_ref[...], w1_ref[...], preferred_element_type=jnp.float32)
    h1 = jnp.maximum(h1 + b1_ref[...], 0.0)

    # Layer 2: Linear + ReLU
    h2 = jnp.dot(h1, w2_ref[...], preferred_element_type=jnp.float32)
    h2 = jnp.maximum(h2 + b2_ref[...], 0.0)

    # Layer 3: Linear (Q-values, no activation) -> lane-dense [TB, N_pad] store
    q = jnp.dot(h2, w3_ref[...], preferred_element_type=jnp.float32)
    o_ref[...] = (q + b3_ref[...]).astype(o_ref.dtype)


@functools.partial(jax.jit, static_argnames=("block_b",))
def qnetwork_forward(x, params, *, block_b: int = 256):
    """x: [B, input_dim] float32; params: dict of (w1,b1,w2,b2,w3,b3).

    Weights are stored transposed vs. PyTorch: [in_features, out_features],
    so the kernel computes y = x @ W + b directly on the MXU.
    """
    w1, b1, w2, b2, w3, b3 = (
        params["w1"], params["b1"], params["w2"],
        params["b2"], params["w3"], params["b3"],
    )
    B, in_dim = x.shape
    hidden = w1.shape[1]
    out_dim = w3.shape[1]

    # --- lane-dense padding of feature dims (done once in the wrapper) -------
    k_pad = _round_up(in_dim, LANE)    # input features  -> multiple of 128
    h_pad = _round_up(hidden, LANE)    # hidden (already 128 by default)
    n_pad = _round_up(out_dim, LANE)   # output features -> multiple of 128

    # --- batch tiling: TB multiple of 8, grid over batch ---------------------
    tb = min(block_b, _round_up(B, SUBLANE))
    b_pad = _round_up(B, tb)
    grid_b = b_pad // tb

    pad2 = lambda a, r, c: jnp.pad(a, ((0, r - a.shape[0]), (0, c - a.shape[1])))

    x_p = pad2(x, b_pad, k_pad)
    w1_p = pad2(w1, k_pad, h_pad)
    b1_p = pad2(b1, 1, h_pad)
    w2_p = pad2(w2, h_pad, h_pad)
    b2_p = pad2(b2, 1, h_pad)
    w3_p = pad2(w3, h_pad, n_pad)
    b3_p = pad2(b3, 1, n_pad)

    const = lambda shp: pl.BlockSpec(shp, lambda i: (0,) * len(shp))

    flops = 2 * B * (in_dim * hidden + hidden * hidden + hidden * out_dim)
    bytes_accessed = 4 * (
        B * in_dim
        + in_dim * hidden + hidden
        + hidden * hidden + hidden
        + hidden * out_dim + out_dim
        + B * out_dim
    )

    q_padded = pl.pallas_call(
        qnet_kernel,
        out_shape=jax.ShapeDtypeStruct((b_pad, n_pad), jnp.float32),
        grid_spec=pl.GridSpec(
            grid=(grid_b,),
            in_specs=[
                pl.BlockSpec((tb, k_pad), lambda i: (i, 0)),   # x: tiled over batch
                const((k_pad, h_pad)), const((1, h_pad)),      # w1, b1 (resident)
                const((h_pad, h_pad)), const((1, h_pad)),      # w2, b2 (resident)
                const((h_pad, n_pad)), const((1, n_pad)),      # w3, b3 (resident)
            ],
            out_specs=pl.BlockSpec((tb, n_pad), lambda i: (i, 0)),
        ),
        compiler_params=pltpu.CompilerParams(
            dimension_semantics=("parallel",),   # shards batch steps across TCs on v7x
        ),
        cost_estimate=pl.CostEstimate(
            flops=flops, transcendentals=0, bytes_accessed=bytes_accessed),
    )(x_p, w1_p, b1_p, w2_p, b2_p, w3_p, b3_p)

    # strip batch / lane padding (cheap XLA slice outside the kernel)
    return q_padded[:B, :out_dim]


def init_qnetwork_params(key, input_dim, output_dim, hidden_dim=128):
    """nn.Linear default init: U(-1/sqrt(fan_in), 1/sqrt(fan_in)).
    Weights stored as [in_features, out_features] (transposed vs. PyTorch)."""
    def linear(k, fan_in, fan_out):
        kw, kb = jax.random.split(k)
        bound = 1.0 / jnp.sqrt(float(fan_in))
        w = jax.random.uniform(kw, (fan_in, fan_out), jnp.float32, -bound, bound)
        b = jax.random.uniform(kb, (1, fan_out), jnp.float32, -bound, bound)
        return w, b

    k1, k2, k3 = jax.random.split(key, 3)
    w1, b1 = linear(k1, input_dim, hidden_dim)
    w2, b2 = linear(k2, hidden_dim, hidden_dim)
    w3, b3 = linear(k3, hidden_dim, output_dim)
    return {"w1": w1, "b1": b1, "w2": w2, "b2": b2, "w3": w3, "b3": b3}


def qnetwork_ref(x, p):
    """Pure-JAX reference for correctness check."""
    h = jnp.maximum(x @ p["w1"] + p["b1"], 0.0)
    h = jnp.maximum(h @ p["w2"] + p["b2"], 0.0)
    return h @ p["w3"] + p["b3"]


if __name__ == "__main__":
    key = jax.random.PRNGKey(0)
    k_params, k_x = jax.random.split(key)

    batch = 8
    input_dim = 16     # observation space dim
    output_dim = 4     # action space dim
    hidden_dim = 128   # QNetwork default

    params = init_qnetwork_params(k_params, input_dim, output_dim, hidden_dim)
    x = jax.random.normal(k_x, (batch, input_dim), dtype=jnp.float32)

    q_values = qnetwork_forward(x, params)
    q_values = jax.block_until_ready(q_values)

    # sanity check vs pure-JAX reference
    q_ref = qnetwork_ref(x, params)
    assert q_values.shape == (batch, output_dim)
    assert jnp.allclose(q_values, q_ref, atol=1e-5, rtol=1e-5)

    # also exercise a larger, non-tile-aligned batch (multiple grid steps + padding)
    x_big = jax.random.normal(jax.random.PRNGKey(1), (600, input_dim), jnp.float32)
    q_big = jax.block_until_ready(qnetwork_forward(x_big, params))
    assert q_big.shape == (600, output_dim)
    assert jnp.allclose(q_big, qnetwork_ref(x_big, params), atol=1e-5, rtol=1e-5)

    print("KERNEL_OK")
</pallas_src>

<mosaic_0001>
module attributes {stable_mosaic.version = 11 : i64} {
  func.func @qnet_kernel(%arg0: i32, %arg1: memref<8x128xf32, #tpu.memory_space<vmem>>, %arg2: memref<128x128xf32, #tpu.memory_space<vmem>>, %arg3: memref<1x128xf32, #tpu.memory_space<vmem>>, %arg4: memref<128x128xf32, #tpu.memory_space<vmem>>, %arg5: memref<1x128xf32, #tpu.memory_space<vmem>>, %arg6: memref<128x128xf32, #tpu.memory_space<vmem>>, %arg7: memref<1x128xf32, #tpu.memory_space<vmem>>, %arg8: memref<8x128xf32, #tpu.memory_space<vmem>>) attributes {dimension_semantics = [#tpu.dimension_semantics<parallel>], iteration_bounds = array<i64: 1>, scalar_prefetch = 0 : i64, scratch_operands = 0 : i64, tpu.core_type = #tpu.core_type<tc>, window_params = [{transform_indices = @transform_0, window_bounds = array<i64: 8, 128>}, {pipeline_mode = #tpu.pipeline_mode<synchronous>, transform_indices = @transform_1, window_bounds = array<i64: 128, 128>}, {pipeline_mode = #tpu.pipeline_mode<synchronous>, transform_indices = @transform_2, window_bounds = array<i64: 1, 128>}, {pipeline_mode = #tpu.pipeline_mode<synchronous>, transform_indices = @transform_3, window_bounds = array<i64: 128, 128>}, {pipeline_mode = #tpu.pipeline_mode<synchronous>, transform_indices = @transform_4, window_bounds = array<i64: 1, 128>}, {pipeline_mode = #tpu.pipeline_mode<synchronous>, transform_indices = @transform_5, window_bounds = array<i64: 128, 128>}, {pipeline_mode = #tpu.pipeline_mode<synchronous>, transform_indices = @transform_6, window_bounds = array<i64: 1, 128>}, {transform_indices = @transform_7, window_bounds = array<i64: 8, 128>}]} {
    %c0 = arith.constant 0 : index
    %c0_0 = arith.constant 0 : index
    %0 = vector.load %arg1[%c0, %c0_0] : memref<8x128xf32, #tpu.memory_space<vmem>>, vector<8x128xf32>
    %c0_1 = arith.constant 0 : index
    %c0_2 = arith.constant 0 : index
    %1 = vector.load %arg2[%c0_1, %c0_2] : memref<128x128xf32, #tpu.memory_space<vmem>>, vector<128x128xf32>
    %cst = arith.constant dense<0.000000e+00> : vector<8x128xf32>
    %2 = tpu.matmul %0, %1, %cst {dimension_numbers = #tpu.dot_dimension_numbers<[1], [0], [0], [1], [0, 0, 1, 1], [], []>} : vector<8x128xf32>, vector<128x128xf32>, vector<8x128xf32> -> vector<8x128xf32>
    %c0_3 = arith.constant 0 : index
    %c0_4 = arith.constant 0 : index
    %3 = vector.load %arg3[%c0_3, %c0_4] : memref<1x128xf32, #tpu.memory_space<vmem>>, vector<1x128xf32>
    %4 = vector.broadcast %3 : vector<1x128xf32> to vector<8x128xf32>
    %5 = arith.addf %2, %4 : vector<8x128xf32>
    %cst_5 = arith.constant 0.000000e+00 : f32
    %6 = vector.broadcast %cst_5 : f32 to vector<8x128xf32>
    %7 = arith.maximumf %5, %6 : vector<8x128xf32>
    %c0_6 = arith.constant 0 : index
    %c0_7 = arith.constant 0 : index
    %8 = vector.load %arg4[%c0_6, %c0_7] : memref<128x128xf32, #tpu.memory_space<vmem>>, vector<128x128xf32>
    %cst_8 = arith.constant dense<0.000000e+00> : vector<8x128xf32>
    %9 = tpu.matmul %7, %8, %cst_8 {dimension_numbers = #tpu.dot_dimension_numbers<[1], [0], [0], [1], [0, 0, 1, 1], [], []>} : vector<8x128xf32>, vector<128x128xf32>, vector<8x128xf32> -> vector<8x128xf32>
    %c0_9 = arith.constant 0 : index
    %c0_10 = arith.constant 0 : index
    %10 = vector.load %arg5[%c0_9, %c0_10] : memref<1x128xf32, #tpu.memory_space<vmem>>, vector<1x128xf32>
    %11 = vector.broadcast %10 : vector<1x128xf32> to vector<8x128xf32>
    %12 = arith.addf %9, %11 : vector<8x128xf32>
    %cst_11 = arith.constant 0.000000e+00 : f32
    %13 = vector.broadcast %cst_11 : f32 to vector<8x128xf32>
    %14 = arith.maximumf %12, %13 : vector<8x128xf32>
    %c0_12 = arith.constant 0 : index
    %c0_13 = arith.constant 0 : index
    %15 = vector.load %arg6[%c0_12, %c0_13] : memref<128x128xf32, #tpu.memory_space<vmem>>, vector<128x128xf32>
    %cst_14 = arith.constant dense<0.000000e+00> : vector<8x128xf32>
    %16 = tpu.matmul %14, %15, %cst_14 {dimension_numbers = #tpu.dot_dimension_numbers<[1], [0], [0], [1], [0, 0, 1, 1], [], []>} : vector<8x128xf32>, vector<128x128xf32>, vector<8x128xf32> -> vector<8x128xf32>
    %c0_15 = arith.constant 0 : index
    %c0_16 = arith.constant 0 : index
    %17 = vector.load %arg7[%c0_15, %c0_16] : memref<1x128xf32, #tpu.memory_space<vmem>>, vector<1x128xf32>
    %18 = vector.broadcast %17 : vector<1x128xf32> to vector<8x128xf32>
    %19 = arith.addf %16, %18 : vector<8x128xf32>
    %c0_17 = arith.constant 0 : index
    %c0_18 = arith.constant 0 : index
    %20 = vector.load %arg8[%c0_17, %c0_18] : memref<8x128xf32, #tpu.memory_space<vmem>>, vector<8x128xf32>
    tpu.vector_store %arg8[%c0_17, %c0_18], %19 {strides = array<i32>} : memref<8x128xf32, #tpu.memory_space<vmem>>, vector<8x128xf32>,
    return
  }
  func.func @transform_0(%arg0: i32) -> (i32, i32) {
    %c0_i32 = arith.constant 0 : i32
    %c0_i32_0 = arith.constant 0 : i32
    return %arg0, %c0_i32 : i32, i32
  }
  func.func @transform_1(%arg0: i32) -> (i32, i32) {
    %c0_i32 = arith.constant 0 : i32
    %c0_i32_0 = arith.constant 0 : i32
    %c0_i32_1 = arith.constant 0 : i32
    return %c0_i32, %c0_i32_0 : i32, i32
  }
  func.func @transform_2(%arg0: i32) -> (i32, i32) {
    %c0_i32 = arith.constant 0 : i32
    %c0_i32_0 = arith.constant 0 : i32
    %c0_i32_1 = arith.constant 0 : i32
    return %c0_i32, %c0_i32_0 : i32, i32
  }
  func.func @transform_3(%arg0: i32) -> (i32, i32) {
    %c0_i32 = arith.constant 0 : i32
    %c0_i32_0 = arith.constant 0 : i32
    %c0_i32_1 = arith.constant 0 : i32
    return %c0_i32, %c0_i32_0 : i32, i32
  }
  func.func @transform_4(%arg0: i32) -> (i32, i32) {
    %c0_i32 = arith.constant 0 : i32
    %c0_i32_0 = arith.constant 0 : i32
    %c0_i32_1 = arith.constant 0 : i32
    return %c0_i32, %c0_i32_0 : i32, i32
  }
  func.func @transform_5(%arg0: i32) -> (i32, i32) {
    %c0_i32 = arith.constant 0 : i32
    %c0_i32_0 = arith.constant 0 : i32
    %c0_i32_1 = arith.constant 0 : i32
    return %c0_i32, %c0_i32_0 : i32, i32
  }
  func.func @transform_6(%arg0: i32) -> (i32, i32) {
    %c0_i32 = arith.constant 0 : i32
    %c0_i32_0 = arith.constant 0 : i32
    %c0_i32_1 = arith.constant 0 : i32
    return %c0_i32, %c0_i32_0 : i32, i32
  }
  func.func @transform_7(%arg0: i32) -> (i32, i32) {
    %c0_i32 = arith.constant 0 : i32
    %c0_i32_0 = arith.constant 0 : i32
    return %arg0, %c0_i32 : i32, i32
  }
}

</mosaic_0001>

<llo_original>
// kernel: qnetwork_forward.1
$region0: #{qnetwork_forward.1}
  #allocation0 [shape = 'u32[]', space=smem, size = 0x4, offset = 0x4, fixed_abs, tag = 'smem constant byte address 0x4 - core index']
  #allocation1 [shape = 'u32[72,128]{1,0:T(1,128)}', space=vmem, size = 0x9000, scoped, tag = 'internal scratch']
  %s0 = inlined_call_operand.vmem [shape: f32[8,128], index: 0, kind: input, shape index: {}]
  %s1 = inlined_call_operand.vmem [shape: f32[128,128], index: 1, kind: input, shape index: {}]
  %s2 = inlined_call_operand.vmem [shape: f32[1,128], index: 2, kind: input, shape index: {}]
  %s3 = inlined_call_operand.vmem [shape: f32[128,128], index: 3, kind: input, shape index: {}]
  %s4 = inlined_call_operand.vmem [shape: f32[1,128], index: 4, kind: input, shape index: {}]
  %s5 = inlined_call_operand.vmem [shape: f32[128,128], index: 5, kind: input, shape index: {}]
  %s6 = inlined_call_operand.vmem [shape: f32[1,128], index: 6, kind: input, shape index: {}]
  %s7 = inlined_call_operand.vmem [shape: f32[8,128], index: 7, kind: output, shape index: {}]
  %s8 = sld [smem:[#allocation0]]
  $region38: #{qnetwork_forward.1} parent=0
    _
  %s10 = ssub.s32 1, %s8
  %s11 = scalar_select 0, %s10, %s8
  // Predicated region
  $region2: #{qnetwork_forward.1} parent=0 // pred_check
    _
  $region3: #{qnetwork_forward.1} parent=0 // pred_check_branch
    %13 = sbr.rel (0) target = $region5
  $region4: #{qnetwork_forward.1} parent=0 // pred_region
    _
  $region5: #{qnetwork_forward.1} parent=0 // pred_fallthru
    _
  // Predicated region
  $region6: #{qnetwork_forward.1} parent=0 // pred_check
    _
  $region7: #{qnetwork_forward.1} parent=0 // pred_check_branch
    %15 = sbr.rel (0) target = $region9
  $region8: #{qnetwork_forward.1} parent=0 // pred_region
    _
  $region9: #{qnetwork_forward.1} parent=0 // pred_fallthru
    _
  // Predicated region
  $region10: #{qnetwork_forward.1} parent=0 // pred_check
    _
  $region11: #{qnetwork_forward.1} parent=0 // pred_check_branch
    %17 = sbr.rel (0) target = $region13
  $region12: #{qnetwork_forward.1} parent=0 // pred_region
    _
  $region13: #{qnetwork_forward.1} parent=0 // pred_fallthru
    _
  // Predicated region
  $region14: #{qnetwork_forward.1} parent=0 // pred_check
    _
  $region15: #{qnetwork_forward.1} parent=0 // pred_check_branch
    %19 = sbr.rel (0) target = $region17
  $region16: #{qnetwork_forward.1} parent=0 // pred_region
    _
  $region17: #{qnetwork_forward.1} parent=0 // pred_fallthru
    _
  // Predicated region
  $region18: #{qnetwork_forward.1} parent=0 // pred_check
    _
  $region19: #{qnetwork_forward.1} parent=0 // pred_check_branch
    %21 = sbr.rel (0) target = $region21
  $region20: #{qnetwork_forward.1} parent=0 // pred_region
    _
  $region21: #{qnetwork_forward.1} parent=0 // pred_fallthru
    _
  // Predicated region
  $region22: #{qnetwork_forward.1} parent=0 // pred_check
    _
  $region23: #{qnetwork_forward.1} parent=0 // pred_check_branch
    %23 = sbr.rel (0) target = $region25
  $region24: #{qnetwork_forward.1} parent=0 // pred_region
    _
  $region25: #{qnetwork_forward.1} parent=0 // pred_fallthru
    _
  // Predicated region
  $region26: #{qnetwork_forward.1} parent=0 // pred_check
    _
  $region27: #{qnetwork_forward.1} parent=0 // pred_check_branch
    %25 = sbr.rel (0) target = $region29
  $region28: #{qnetwork_forward.1} parent=0 // pred_region
    _
  $region29: #{qnetwork_forward.1} parent=0 // pred_fallthru
    _
  %v26 = vld [vmem:[%s0] sm:$0xff]
  %v27 = vld [vmem:[%s1] sm:$0xff]
  %v28 = vld [vmem:[%s1 + $0x8] sm:$0xff]
  %v29 = vld [vmem:[%s1 + $0x10] sm:$0xff]
  %v30 = vld [vmem:[%s1 + $0x18] sm:$0xff]
  %v31 = vld [vmem:[%s1 + $0x20] sm:$0xff]
  %v32 = vld [vmem:[%s1 + $0x28] sm:$0xff]
  %v33 = vld [vmem:[%s1 + $0x30] sm:$0xff]
  %v34 = vld [vmem:[%s1 + $0x38] sm:$0xff]
  %v35 = vld [vmem:[%s1 + $0x40] sm:$0xff]
  %v36 = vld [vmem:[%s1 + $0x48] sm:$0xff]
  %v37 = vld [vmem:[%s1 + $0x50] sm:$0xff]
  %v38 = vld [vmem:[%s1 + $0x58] sm:$0xff]
  %v39 = vld [vmem:[%s1 + $0x60] sm:$0xff]
  %v40 = vld [vmem:[%s1 + $0x68] sm:$0xff]
  %v41 = vld [vmem:[%s1 + $0x70] sm:$0xff]
  %v42 = vld [vmem:[%s1 + $0x78] sm:$0xff]
  %v43 = vld [vmem:[%s2] sm:$0x1]
  %v45 = vperm.slane %v43, 0
  %47 = vmatpush.msra.mxu0 %v42
  %48 = vmatpush.msra.mxu0 %v41
  %49 = vmatpush.msra.mxu0 %v40
  %50 = vmatpush.msra.mxu0 %v39
  %51 = vmatpush.msra.mxu0 %v38
  %52 = vmatpush.msra.mxu0 %v37
  %53 = vmatpush.msra.mxu0 %v36
  %54 = vmatpush.msra.mxu0 %v35
  %55 = vmatpush.msra.mxu0 %v34
  %56 = vmatpush.msra.mxu0 %v33
  %57 = vmatpush.msra.mxu0 %v32
  %58 = vmatpush.msra.mxu0 %v31
  %59 = vmatpush.msra.mxu0 %v30
  %60 = vmatpush.msra.mxu0 %v29
  %61 = vmatpush.msra.mxu0 %v28
  %62 = vmatpush.msra.mxu0 %v27
  %63 = vmatmul.f32.gmra.mxu0 %v26
  %v64 = vpop.f32.mrf.mxu0
  %v65 = vadd.f32 %v45, %v64
  %66 = vdwg.mxu0
  %v67 = vmax.f32 %v65, 0.0
  %v68 = vld [vmem:[%s3] sm:$0xff]
  %v69 = vld [vmem:[%s3 + $0x8] sm:$0xff]
  %v70 = vld [vmem:[%s3 + $0x10] sm:$0xff]
  %v71 = vld [vmem:[%s3 + $0x18] sm:$0xff]
  %v72 = vld [vmem:[%s3 + $0x20] sm:$0xff]
  %v73 = vld [vmem:[%s3 + $0x28] sm:$0xff]
  %v74 = vld [vmem:[%s3 + $0x30] sm:$0xff]
  %v75 = vld [vmem:[%s3 + $0x38] sm:$0xff]
  %v76 = vld [vmem:[%s3 + $0x40] sm:$0xff]
  %v77 = vld [vmem:[%s3 + $0x48] sm:$0xff]
  %v78 = vld [vmem:[%s3 + $0x50] sm:$0xff]
  %v79 = vld [vmem:[%s3 + $0x58] sm:$0xff]
  %v80 = vld [vmem:[%s3 + $0x60] sm:$0xff]
  %v81 = vld [vmem:[%s3 + $0x68] sm:$0xff]
  %v82 = vld [vmem:[%s3 + $0x70] sm:$0xff]
  %v83 = vld [vmem:[%s3 + $0x78] sm:$0xff]
  %v84 = vld [vmem:[%s4] sm:$0x1]
  %v86 = vperm.slane %v84, 0
  %88 = vmatpush.msra.mxu0 %v83
  %89 = vmatpush.msra.mxu0 %v82
  %90 = vmatpush.msra.mxu0 %v81
  %91 = vmatpush.msra.mxu0 %v80
  %92 = vmatpush.msra.mxu0 %v79
  %93 = vmatpush.msra.mxu0 %v78
  %94 = vmatpush.msra.mxu0 %v77
  %95 = vmatpush.msra.mxu0 %v76
  %96 = vmatpush.msra.mxu0 %v75
  %97 = vmatpush.msra.mxu0 %v74
  %98 = vmatpush.msra.mxu0 %v73
  %99 = vmatpush.msra.mxu0 %v72
  %100 = vmatpush.msra.mxu0 %v71
  %101 = vmatpush.msra.mxu0 %v70
  %102 = vmatpush.msra.mxu0 %v69
  %103 = vmatpush.msra.mxu0 %v68
  %104 = vmatmul.f32.gmra.mxu0 %v67
  %v105 = vpop.f32.mrf.mxu0
  %v106 = vadd.f32 %v86, %v105
  %107 = vdwg.mxu0
  %v108 = vmax.f32 %v106, 0.0
  %v109 = vld [vmem:[%s5] sm:$0xff]
  %v110 = vld [vmem:[%s5 + $0x8] sm:$0xff]
  %v111 = vld [vmem:[%s5 + $0x10] sm:$0xff]
  %v112 = vld [vmem:[%s5 + $0x18] sm:$0xff]
  %v113 = vld [vmem:[%s5 + $0x20] sm:$0xff]
  %v114 = vld [vmem:[%s5 + $0x28] sm:$0xff]
  %v115 = vld [vmem:[%s5 + $0x30] sm:$0xff]
  %v116 = vld [vmem:[%s5 + $0x38] sm:$0xff]
  %v117 = vld [vmem:[%s5 + $0x40] sm:$0xff]
  %v118 = vld [vmem:[%s5 + $0x48] sm:$0xff]
  %v119 = vld [vmem:[%s5 + $0x50] sm:$0xff]
  %v120 = vld [vmem:[%s5 + $0x58] sm:$0xff]
  %v121 = vld [vmem:[%s5 + $0x60] sm:$0xff]
  %v122 = vld [vmem:[%s5 + $0x68] sm:$0xff]
  %v123 = vld [vmem:[%s5 + $0x70] sm:$0xff]
  %v124 = vld [vmem:[%s5 + $0x78] sm:$0xff]
  %v125 = vld [vmem:[%s6] sm:$0x1]
  %v127 = vperm.slane %v125, 0
  %129 = vmatpush.msra.mxu0 %v124
  %130 = vmatpush.msra.mxu0 %v123
  %131 = vmatpush.msra.mxu0 %v122
  %132 = vmatpush.msra.mxu0 %v121
  %133 = vmatpush.msra.mxu0 %v120
  %134 = vmatpush.msra.mxu0 %v119
  %135 = vmatpush.msra.mxu0 %v118
  %136 = vmatpush.msra.mxu0 %v117
  %137 = vmatpush.msra.mxu0 %v116
  %138 = vmatpush.msra.mxu0 %v115
  %139 = vmatpush.msra.mxu0 %v114
  %140 = vmatpush.msra.mxu0 %v113
  %141 = vmatpush.msra.mxu0 %v112
  %142 = vmatpush.msra.mxu0 %v111
  %143 = vmatpush.msra.mxu0 %v110
  %144 = vmatpush.msra.mxu0 %v109
  %145 = vmatmul.f32.gmra.mxu0 %v108
  %v146 = vpop.f32.mrf.mxu0
  %v147 = vadd.f32 %v127, %v146
  %148 = vdwg.mxu0
  %149 = vst [vmem:[%s7] sm:$0xff] %v147
  // Predicated region
  $region30: #{qnetwork_forward.1} parent=0 // pred_check
    _
  $region31: #{qnetwork_forward.1} parent=0 // pred_check_branch
    %151 = sbr.rel (0) target = $region33
  $region32: #{qnetwork_forward.1} parent=0 // pred_region
    _
  $region33: #{qnetwork_forward.1} parent=0 // pred_fallthru
    _
  // Predicated region
  $region34: #{qnetwork_forward.1} parent=0 // pred_check
    _
  $region35: #{qnetwork_forward.1} parent=0 // pred_check_branch
    %153 = sbr.rel (0) target = $region37
  $region36: #{qnetwork_forward.1} parent=0 // pred_region
    _
  $region37: #{qnetwork_forward.1} parent=0 // pred_fallthru
    _

</llo_original>
